<compile_context>
chip_gen: v5e
topology: v5e:2x2
jax: 0.10.0
libtpu: 0.0.40
codegen_flags: <defaults>
</compile_context>

<pallas_src>
import math
import jax
import jax.numpy as jnp
from jax.experimental import pallas as pl
from jax.experimental.pallas import tpu as pltpu


def _attn_kernel(xlast_ref, x2_ref, wq_ref, bq_ref, wkv_ref, bkv_ref, wout_ref,
                 v_ref, a_ref):
    Bt, T = a_ref.shape
    H = v_ref.shape[1]
    mm = wkv_ref.dtype                      # matmul operand dtype (f32 accumulate)

    # Q only for the last timestep: (Bt, D) @ (D, H)  -- ~1/T of the K-side FLOPs.
    q = jnp.dot(xlast_ref[...].astype(mm), wq_ref[...],
                preferred_element_type=jnp.float32) + bq_ref[...]       # (Bt, H)

    # Fused K/V: one MXU push, (Bt*T, D) @ (D, 2H).  x arrives pre-flattened via a
    # 2-D BlockSpec (no input reshape); the output reshape below is a free
    # sublane-aligned view whenever T % 8 == 0.
    kv = jnp.dot(x2_ref[...].astype(mm), wkv_ref[...],
                 preferred_element_type=jnp.float32) + bkv_ref[...]     # (Bt*T, 2H)
    kv = kv.reshape(Bt, T, 2 * H)
    k = kv[..., :H]                         # bias: bk + b_in (folded on the host)
    vv = kv[..., H:]                        # bias: bv
    # (Keep H a multiple of 128 in production so this lane split is an aligned view.)

    # Additive attention: h = tanh(q + k + b_in); b_in already inside the K bias.
    h = jnp.tanh(q[:, None, :] + k)                                     # (Bt, T, H)

    # e = W_out(h): N=1 projection as VPU mul + XLU lane-reduce; MXU stays free.
    # b_out is a uniform pre-softmax constant -> cancels in the softmax -> dropped.
    e = jnp.sum(h * wout_ref[...], axis=-1)                             # (Bt, T)

    # Softmax over time; reciprocal on the EUP + one Newton refinement step.
    m = jnp.max(e, axis=-1, keepdims=True)
    p = jnp.exp(e - m)                                                  # unnormalized
    denom = jnp.sum(p, axis=-1, keepdims=True)
    r = pl.reciprocal(denom, approx=True)
    r = r * (2.0 - denom * r)                                           # ~f32 accuracy

    # Weighted V-sum with the UNNORMALIZED p, scaled by r at the end, so the
    # p -> V path does not depend on the normalized-a (lane-dense) layout.
    v_un = jnp.sum(p[:, :, None] * vv, axis=1)                          # (Bt, H)
    v_ref[...] = (v_un * r).astype(v_ref.dtype)                         # lane-dense (Bt, H)
    a_ref[...] = (p * r).astype(a_ref.dtype)                            # lane-dense (Bt, T)


def _pick_bt(B, T, D, H, *, in_itemsize=4, vmem_budget_bytes=24 << 20):
    """Largest batch tile Bt that (a) divides B, (b) is a multiple of 8 or equals B
    (the (8,128) layout rule for the (Bt, ...) output / x_last blocks), (c) fits a
    conservative VMEM byte budget, and (d) when possible leaves >= 2 grid steps so
    both v7x TensorCores get work on the 'parallel' grid axis."""
    per_bt = (2 * T * D * in_itemsize       # double-buffered x tile
              + 3 * T * H * 4               # (T,2H) kv + (T,H) h f32 intermediates
              + 2 * (H + T + D) * 4)        # v/a output buffers + x_last tile
    cap = max(1, int(vmem_budget_bytes // per_bt))
    valid = [bt for bt in range(1, B + 1)
             if B % bt == 0 and (bt % 8 == 0 or bt == B)]
    cands = [bt for bt in valid if bt <= cap] or valid   # never fail; cap is advisory
    multi = [bt for bt in cands if B // bt >= 2]         # >= 2 grid steps (v7x megacore)
    return max(multi) if multi else max(cands)


def _const_spec(arr, single_buffer):
    """Full-array, constant-index BlockSpec.  With single_buffer=True the weight /
    bias is not double-buffered (saves VMEM on v7x's 64 MiB)."""
    nd = arr.ndim
    if single_buffer:
        return pl.BlockSpec(arr.shape, lambda b, _nd=nd: (0,) * _nd,
                            pipeline_mode=pl.Buffered(1))
    return pl.BlockSpec(arr.shape, lambda b, _nd=nd: (0,) * _nd)


def final_attention_qkv(x, params, *, batch_tile=None, matmul_dtype=jnp.bfloat16,
                        vmem_limit_bytes=48 << 20, single_buffer_weights=False,
                        x_buffering=None):
    """x: (B, T, D).  params: dict of weights in (in, out) layout.

    matmul_dtype: MXU operand dtype (default bf16 on all generations; accumulation
      stays f32 and the cast happens per-tile inside the kernel).  Pass jnp.float32
      for bit-tighter results.
    single_buffer_weights: set True on v7x to stop double-buffering the constant
      weight/bias operands.
    x_buffering: e.g. 3 to deepen the x pipeline on v6e (HBM-bound regime).
    """
    B, T, D = x.shape
    H = params["wout"].shape[1]
    mm = matmul_dtype if matmul_dtype is not None else x.dtype

    Bt = batch_tile or _pick_bt(B, T, D, H, in_itemsize=x.dtype.itemsize,
                                vmem_budget_bytes=vmem_limit_bytes // 2)
    assert B % Bt == 0, "batch tile must divide B"
    assert Bt % 8 == 0 or Bt == B, "batch tile must be a multiple of 8 or equal B"

    # Host-side fusion (weights are tiny; one-time cost):
    #   * K/V weights fused into (D, 2H); b_in folded into the K bias.
    #   * Q kept separate so it is only computed for the final timestep.
    w_kv = jnp.concatenate([params["wk"], params["wv"]], axis=1).astype(mm)
    b_kv = jnp.concatenate(
        [params["bk"] + params["b_in"][0, 0], params["bv"]], axis=1)     # (1, 2H) f32
    wq = params["wq"].astype(mm)                                         # (D, H)
    bq = params["bq"]                                                    # (1, H) f32
    wout = params["wout"]                                                # (1, H) f32

    x2 = x.reshape(B * T, D)       # free (contiguous) reshape; 2-D BlockSpec below
    x_last = x[:, -1, :]           # (B, D): the only rows Q needs

    if x_buffering is not None:
        x_spec = pl.BlockSpec((Bt * T, D), lambda b: (b, 0),
                              pipeline_mode=pl.Buffered(x_buffering))
    else:
        x_spec = pl.BlockSpec((Bt * T, D), lambda b: (b, 0))

    grid_spec = pltpu.PrefetchScalarGridSpec(
        num_scalar_prefetch=0,
        grid=(B // Bt,),
        in_specs=[
            pl.BlockSpec((Bt, D), lambda b: (b, 0)),     # x_last batch tile
            x_spec,                                       # x batch tile, pre-flattened
            _const_spec(wq, single_buffer_weights),
            _const_spec(bq, single_buffer_weights),
            _const_spec(w_kv, single_buffer_weights),
            _const_spec(b_kv, single_buffer_weights),
            _const_spec(wout, single_buffer_weights),
        ],
        out_specs=[
            pl.BlockSpec((Bt, H), lambda b: (b, 0)),      # v (lane-dense)
            pl.BlockSpec((Bt, T), lambda b: (b, 0)),      # a (lane-dense)
        ],
    )

    v, a = pl.pallas_call(
        _attn_kernel,
        out_shape=(
            jax.ShapeDtypeStruct((B, H), jnp.float32),
            jax.ShapeDtypeStruct((B, T), jnp.float32),
        ),
        grid_spec=grid_spec,
        compiler_params=pltpu.CompilerParams(
            dimension_semantics=("parallel",),
            vmem_limit_bytes=vmem_limit_bytes),
    )(x_last, x2, wq, bq, w_kv, b_kv, wout)
    return v, a


def _init_params(key, D, H):
    """Deterministic kaiming_uniform(a=sqrt(5))-style init, like the module."""
    ks = jax.random.split(key, 8)
    def kaiming(k, fan_in, shape):
        bound = 1.0 / math.sqrt(fan_in)
        return jax.random.uniform(k, shape, jnp.float32, -bound, bound)
    return {
        # Linear weights stored as (in, out) == W^T of torch's (out, in)
        "wq": kaiming(ks[0], D, (D, H)),
        "bq": kaiming(ks[1], D, (1, H)),
        "wk": kaiming(ks[2], D, (D, H)),
        "bk": kaiming(ks[3], D, (1, H)),
        "wv": kaiming(ks[4], D, (D, H)),
        "bv": kaiming(ks[5], D, (1, H)),
        "wout": kaiming(ks[6], H, (1, H)),   # row layout (== torch's (1, H) weight)
        "bout": kaiming(ks[7], H, (1, 1)),
        "b_in": jnp.zeros((1, 1), jnp.float32),
        # Wh / Wa / ba exist in the module but are unused for 'add' attention.
    }


def _reference(x, p):
    """Pure-JAX reference mirroring the PyTorch forward (attention_type='add')."""
    q = x[:, -1, :] @ p["wq"] + p["bq"]                     # (B, H)
    k = x @ p["wk"] + p["bk"]                               # (B, T, H)
    v = x @ p["wv"] + p["bv"]                               # (B, T, H)
    h = jnp.tanh(q[:, None, :] + k + p["b_in"][0, 0])       # (B, T, H)
    e = jnp.einsum("bth,h->bt", h, p["wout"][0]) + p["bout"][0, 0]
    a = jax.nn.softmax(e, axis=-1)                          # (B, T)
    out = jnp.einsum("bt,bth->bh", a, v)                    # (B, H)
    return out, a


if __name__ == "__main__":
    B, T, D, H = 2, 8, 32, 32
    key = jax.random.PRNGKey(0)
    kx, kp = jax.random.split(key)
    x = jax.random.normal(kx, (B, T, D), jnp.float32)
    params = _init_params(kp, D, H)

    v_ref, a_ref = _reference(x, params)

    # f32-matmul path: tight check (tolerance covers the EUP recip + Newton step).
    v32, a32 = jax.block_until_ready(
        final_attention_qkv(x, params, matmul_dtype=jnp.float32))
    assert v32.shape == (B, H) and a32.shape == (B, T)
    assert jnp.allclose(v32, v_ref, atol=1e-3, rtol=1e-3), float(jnp.max(jnp.abs(v32 - v_ref)))
    assert jnp.allclose(a32, a_ref, atol=1e-3, rtol=1e-3), float(jnp.max(jnp.abs(a32 - a_ref)))

    # Default bf16-matmul path (f32 accumulation): looser check validating the
    # production configuration's tolerance.
    vbf, abf = jax.block_until_ready(final_attention_qkv(x, params))
    assert jnp.allclose(vbf, v_ref, atol=2e-2, rtol=2e-2), float(jnp.max(jnp.abs(vbf - v_ref)))
    assert jnp.allclose(abf, a_ref, atol=2e-2, rtol=2e-2), float(jnp.max(jnp.abs(abf - a_ref)))

    # TODO(synk): dropout on the attention weights is identity at inference; no RNG path implemented.
    print("KERNEL_OK")
</pallas_src>

<mosaic_0001>
module attributes {stable_mosaic.version = 11 : i64} {
  func.func @_attn_kernel(%arg0: i32, %arg1: memref<2x32xf32, #tpu.memory_space<vmem>>, %arg2: memref<16x32xf32, #tpu.memory_space<vmem>>, %arg3: memref<32x32xf32, #tpu.memory_space<vmem>>, %arg4: memref<1x32xf32, #tpu.memory_space<vmem>>, %arg5: memref<32x64xf32, #tpu.memory_space<vmem>>, %arg6: memref<1x64xf32, #tpu.memory_space<vmem>>, %arg7: memref<1x32xf32, #tpu.memory_space<vmem>>, %arg8: memref<2x32xf32, #tpu.memory_space<vmem>>, %arg9: memref<2x8xf32, #tpu.memory_space<vmem>>) attributes {dimension_semantics = [#tpu.dimension_semantics<parallel>], iteration_bounds = array<i64: 1>, scalar_prefetch = 0 : i64, scratch_operands = 0 : i64, tpu.core_type = #tpu.core_type<tc>, window_params = [{transform_indices = @transform_0, window_bounds = array<i64: 2, 32>}, {transform_indices = @transform_1, window_bounds = array<i64: 16, 32>}, {pipeline_mode = #tpu.pipeline_mode<synchronous>, transform_indices = @transform_2, window_bounds = array<i64: 32, 32>}, {pipeline_mode = #tpu.pipeline_mode<synchronous>, transform_indices = @transform_3, window_bounds = array<i64: 1, 32>}, {pipeline_mode = #tpu.pipeline_mode<synchronous>, transform_indices = @transform_4, window_bounds = array<i64: 32, 64>}, {pipeline_mode = #tpu.pipeline_mode<synchronous>, transform_indices = @transform_5, window_bounds = array<i64: 1, 64>}, {pipeline_mode = #tpu.pipeline_mode<synchronous>, transform_indices = @transform_6, window_bounds = array<i64: 1, 32>}, {transform_indices = @transform_7, window_bounds = array<i64: 2, 32>}, {transform_indices = @transform_8, window_bounds = array<i64: 2, 8>}]} {
    %c0 = arith.constant 0 : index
    %c0_0 = arith.constant 0 : index
    %0 = vector.load %arg1[%c0, %c0_0] : memref<2x32xf32, #tpu.memory_space<vmem>>, vector<2x32xf32>
    %c0_1 = arith.constant 0 : index
    %c0_2 = arith.constant 0 : index
    %1 = vector.load %arg3[%c0_1, %c0_2] : memref<32x32xf32, #tpu.memory_space<vmem>>, vector<32x32xf32>
    %cst = arith.constant dense<0.000000e+00> : vector<2x32xf32>
    %2 = tpu.matmul %0, %1, %cst {dimension_numbers = #tpu.dot_dimension_numbers<[1], [0], [0], [1], [0, 0, 1, 1], [], []>} : vector<2x32xf32>, vector<32x32xf32>, vector<2x32xf32> -> vector<2x32xf32>
    %c0_3 = arith.constant 0 : index
    %c0_4 = arith.constant 0 : index
    %3 = vector.load %arg4[%c0_3, %c0_4] : memref<1x32xf32, #tpu.memory_space<vmem>>, vector<1x32xf32>
    %4 = vector.broadcast %3 : vector<1x32xf32> to vector<2x32xf32>
    %5 = arith.addf %2, %4 : vector<2x32xf32>
    %c0_5 = arith.constant 0 : index
    %c0_6 = arith.constant 0 : index
    %6 = vector.load %arg2[%c0_5, %c0_6] : memref<16x32xf32, #tpu.memory_space<vmem>>, vector<16x32xf32>
    %c0_7 = arith.constant 0 : index
    %c0_8 = arith.constant 0 : index
    %7 = vector.load %arg5[%c0_7, %c0_8] : memref<32x64xf32, #tpu.memory_space<vmem>>, vector<32x64xf32>
    %cst_9 = arith.constant dense<0.000000e+00> : vector<16x64xf32>
    %8 = tpu.matmul %6, %7, %cst_9 {dimension_numbers = #tpu.dot_dimension_numbers<[1], [0], [0], [1], [0, 0, 1, 1], [], []>} : vector<16x32xf32>, vector<32x64xf32>, vector<16x64xf32> -> vector<16x64xf32>
    %c0_10 = arith.constant 0 : index
    %c0_11 = arith.constant 0 : index
    %9 = vector.load %arg6[%c0_10, %c0_11] : memref<1x64xf32, #tpu.memory_space<vmem>>, vector<1x64xf32>
    %10 = vector.broadcast %9 : vector<1x64xf32> to vector<16x64xf32>
    %11 = arith.addf %8, %10 : vector<16x64xf32>
    %12 = vector.shape_cast %11 : vector<16x64xf32> to vector<2x8x64xf32>
    %13 = vector.extract_strided_slice %12 {offsets = [0, 0, 0], sizes = [2, 8, 32], strides = [1, 1, 1]} : vector<2x8x64xf32> to vector<2x8x32xf32>
    %14 = vector.extract_strided_slice %12 {offsets = [0, 0, 32], sizes = [2, 8, 32], strides = [1, 1, 1]} : vector<2x8x64xf32> to vector<2x8x32xf32>
    %15 = vector.shape_cast %5 : vector<2x32xf32> to vector<2x1x32xf32>
    %16 = vector.broadcast %15 : vector<2x1x32xf32> to vector<2x8x32xf32>
    %17 = arith.addf %16, %13 : vector<2x8x32xf32>
    %18 = math.tanh %17 : vector<2x8x32xf32>
    %c0_12 = arith.constant 0 : index
    %c0_13 = arith.constant 0 : index
    %19 = vector.load %arg7[%c0_12, %c0_13] : memref<1x32xf32, #tpu.memory_space<vmem>>, vector<1x32xf32>
    %20 = vector.shape_cast %19 : vector<1x32xf32> to vector<1x1x32xf32>
    %21 = vector.broadcast %20 : vector<1x1x32xf32> to vector<2x8x32xf32>
    %22 = arith.mulf %18, %21 : vector<2x8x32xf32>
    %cst_14 = arith.constant dense<0.000000e+00> : vector<2x8xf32>
    %23 = vector.multi_reduction <add>, %22, %cst_14 [2] : vector<2x8x32xf32> to vector<2x8xf32>
    %cst_15 = arith.constant dense<0xFF800000> : vector<2xf32>
    %24 = vector.multi_reduction <maximumf>, %23, %cst_15 [1] : vector<2x8xf32> to vector<2xf32>
    %25 = vector.shape_cast %24 : vector<2xf32> to vector<2x1xf32>
    %26 = vector.broadcast %25 : vector<2x1xf32> to vector<2x8xf32>
    %27 = arith.subf %23, %26 : vector<2x8xf32>
    %28 = math.exp %27 : vector<2x8xf32>
    %cst_16 = arith.constant dense<0.000000e+00> : vector<2xf32>
    %29 = vector.multi_reduction <add>, %28, %cst_16 [1] : vector<2x8xf32> to vector<2xf32>
    %30 = vector.shape_cast %29 : vector<2xf32> to vector<2x1xf32>
    %31 = tpu.reciprocal %30 {approx = true} : vector<2x1xf32> -> vector<2x1xf32>
    %32 = arith.mulf %30, %31 : vector<2x1xf32>
    %cst_17 = arith.constant 2.000000e+00 : f32
    %33 = vector.broadcast %cst_17 : f32 to vector<2x1xf32>
    %34 = arith.subf %33, %32 : vector<2x1xf32>
    %35 = arith.mulf %31, %34 : vector<2x1xf32>
    %36 = vector.shape_cast %28 : vector<2x8xf32> to vector<2x8x1xf32>
    %37 = vector.broadcast %36 : vector<2x8x1xf32> to vector<2x8x32xf32>
    %38 = arith.mulf %37, %14 : vector<2x8x32xf32>
    %cst_18 = arith.constant dense<0.000000e+00> : vector<2x32xf32>
    %39 = vector.multi_reduction <add>, %38, %cst_18 [1] : vector<2x8x32xf32> to vector<2x32xf32>
    %40 = vector.broadcast %35 : vector<2x1xf32> to vector<2x32xf32>
    %41 = arith.mulf %39, %40 : vector<2x32xf32>
    %c0_19 = arith.constant 0 : index
    %c0_20 = arith.constant 0 : index
    %42 = vector.load %arg8[%c0_19, %c0_20] : memref<2x32xf32, #tpu.memory_space<vmem>>, vector<2x32xf32>
    tpu.vector_store %arg8[%c0_19, %c0_20], %41 {strides = array<i32>} : memref<2x32xf32, #tpu.memory_space<vmem>>, vector<2x32xf32>,
    %43 = vector.broadcast %35 : vector<2x1xf32> to vector<2x8xf32>
    %44 = arith.mulf %28, %43 : vector<2x8xf32>
    %c0_21 = arith.constant 0 : index
    %c0_22 = arith.constant 0 : index
    %45 = vector.load %arg9[%c0_21, %c0_22] : memref<2x8xf32, #tpu.memory_space<vmem>>, vector<2x8xf32>
    tpu.vector_store %arg9[%c0_21, %c0_22], %44 {strides = array<i32>} : memref<2x8xf32, #tpu.memory_space<vmem>>, vector<2x8xf32>,
    return
  }
  func.func @transform_0(%arg0: i32) -> (i32, i32) {
    %c0_i32 = arith.constant 0 : i32
    %c0_i32_0 = arith.constant 0 : i32
    return %arg0, %c0_i32 : i32, i32
  }
  func.func @transform_1(%arg0: i32) -> (i32, i32) {
    %c0_i32 = arith.constant 0 : i32
    %c0_i32_0 = arith.constant 0 : i32
    return %arg0, %c0_i32 : i32, i32
  }
  func.func @transform_2(%arg0: i32) -> (i32, i32) {
    %c0_i32 = arith.constant 0 : i32
    %c0_i32_0 = arith.constant 0 : i32
    %c0_i32_1 = arith.constant 0 : i32
    return %c0_i32, %c0_i32_0 : i32, i32
  }
  func.func @transform_3(%arg0: i32) -> (i32, i32) {
    %c0_i32 = arith.constant 0 : i32
    %c0_i32_0 = arith.constant 0 : i32
    %c0_i32_1 = arith.constant 0 : i32
    return %c0_i32, %c0_i32_0 : i32, i32
  }
  func.func @transform_4(%arg0: i32) -> (i32, i32) {
    %c0_i32 = arith.constant 0 : i32
    %c0_i32_0 = arith.constant 0 : i32
    %c0_i32_1 = arith.constant 0 : i32
    return %c0_i32, %c0_i32_0 : i32, i32
  }
  func.func @transform_5(%arg0: i32) -> (i32, i32) {
    %c0_i32 = arith.constant 0 : i32
    %c0_i32_0 = arith.constant 0 : i32
    %c0_i32_1 = arith.constant 0 : i32
    return %c0_i32, %c0_i32_0 : i32, i32
  }
  func.func @transform_6(%arg0: i32) -> (i32, i32) {
    %c0_i32 = arith.constant 0 : i32
    %c0_i32_0 = arith.constant 0 : i32
    %c0_i32_1 = arith.constant 0 : i32
    return %c0_i32, %c0_i32_0 : i32, i32
  }
  func.func @transform_7(%arg0: i32) -> (i32, i32) {
    %c0_i32 = arith.constant 0 : i32
    %c0_i32_0 = arith.constant 0 : i32
    return %arg0, %c0_i32 : i32, i32
  }
  func.func @transform_8(%arg0: i32) -> (i32, i32) {
    %c0_i32 = arith.constant 0 : i32
    %c0_i32_0 = arith.constant 0 : i32
    return %arg0, %c0_i32 : i32, i32
  }
}

</mosaic_0001>

<llo_original>
// kernel: tpu_custom_call.1
$region0: #{tpu_custom_call.1}
  #allocation0 [shape = 'u32[]', space=smem, size = 0x4, offset = 0x4, fixed_abs, tag = 'smem constant byte address 0x4 - core index']
  #allocation1 [shape = 'u32[72,128]{1,0:T(1,128)}', space=vmem, size = 0x9000, scoped, tag = 'internal scratch']
  %s0 = inlined_call_operand.hbm [shape: f32[2,32], index: 0, kind: input, shape index: {}]
  %s1 = inlined_call_operand.hbm [shape: f32[16,32], index: 1, kind: input, shape index: {}]
  %s2 = inlined_call_operand.hbm [shape: f32[32,32], index: 2, kind: input, shape index: {}]
  %s3 = inlined_call_operand.vmem [shape: f32[1,32], index: 3, kind: input, shape index: {}]
  %s4 = inlined_call_operand.hbm [shape: f32[32,64], index: 4, kind: input, shape index: {}]
  %s5 = inlined_call_operand.vmem [shape: f32[1,64], index: 5, kind: input, shape index: {}]
  %s6 = inlined_call_operand.vmem [shape: f32[1,32], index: 6, kind: input, shape index: {}]
  %s7 = inlined_call_operand.hbm [shape: f32[2,32], index: 7, kind: output, shape index: {0}]
  %s8 = inlined_call_operand.hbm [shape: f32[2,8], index: 8, kind: output, shape index: {1}]
  %9 = xla_tuple %s7, %s8
  %s10 = sld [smem:[#allocation0]]
  $region62: #{tpu_custom_call.1} parent=0
    _
  %s12 = ssub.s32 1, %s10
  %s13 = scalar_select 0, %s12, %s10
  $region1: #{tpu_custom_call.1} parent=0
    #allocation2 [shape = 'u8[1024]{0}', space=vmem, size = 0x400, scoped, tag = 'input window, operand 0, single buffered']
    #allocation3 [shape = 's32[1]{0}', space=sflag, size = 0x4, scoped, tag = 'scoped memory for tpu_custom_call.1']
    #allocation4 [shape = 's32[1]{0}', space=sflag, size = 0x4, scoped, tag = 'scoped memory for tpu_custom_call.1']
    #allocation5 [shape = 'u8[8192]{0}', space=vmem, size = 0x2000, scoped, tag = 'input window, operand 1, single buffered']
    #allocation6 [shape = 's32[1]{0}', space=sflag, size = 0x4, scoped, tag = 'scoped memory for tpu_custom_call.1']
    #allocation7 [shape = 'u8[16384]{0}', space=vmem, size = 0x4000, scoped, tag = 'input window, operand 2, single buffered']
    #allocation8 [shape = 'u8[16384]{0}', space=vmem, size = 0x4000, scoped, tag = 'input window, operand 4, single buffered']
    #allocation9 [shape = 's32[1]{0}', space=sflag, size = 0x4, scoped, tag = 'scoped memory for tpu_custom_call.1']
    #allocation10 [shape = 'u8[1024]{0}', space=vmem, size = 0x400, scoped, tag = 'output window, operand 0, single buffered']
    #allocation11 [shape = 'u8[1024]{0}', space=vmem, size = 0x400, scoped, tag = 'output window, operand 1, single buffered']
    #allocation12 [shape = 's32[1]{0}', space=sflag, size = 0x4, scoped, tag = 'scoped memory for tpu_custom_call.1']
    %14 = vsyncpa [#allocation3], 0
    %15 = vsyncpa [#allocation6], 0
    %16 = vsyncpa [#allocation9], 0
    %17 = vsyncpa [#allocation4], 0
    %18 = vsyncpa [#allocation12], 0
    // Predicated region
    $region2: #{tpu_custom_call.1} parent=1 // pred_check
      _
    $region3: #{tpu_custom_call.1} parent=1 // pred_check_branch
      %20 = sbr.rel (0) target = $region5
    $region4: #{tpu_custom_call.1} parent=1 // pred_region
      %22 = vsyncadd [#allocation3], 0
      %s24 = sshll.u32 %s0, 4
      %s25 = int_to_ptr.hbm [resolvable:$true] %s24
      %s26 = sshll.u32 [#allocation2], 4
      %s27 = int_to_ptr.vmem [resolvable:$true] %s26
      %29 = dma.hbm_to_vmem [thread:$0]  %s25, 32, %s27, [#allocation3]
    $region5: #{tpu_custom_call.1} parent=1 // pred_fallthru
      _
    // Predicated region
    $region6: #{tpu_custom_call.1} parent=1 // pred_check
      _
    $region7: #{tpu_custom_call.1} parent=1 // pred_check_branch
      %31 = sbr.rel (0) target = $region9
    $region8: #{tpu_custom_call.1} parent=1 // pred_region
      %33 = vsyncadd [#allocation6], 0
      %s34 = sshll.u32 %s1, 4
      %s35 = int_to_ptr.hbm [resolvable:$true] %s34
      %s36 = sshll.u32 [#allocation5], 4
      %s37 = int_to_ptr.vmem [resolvable:$true] %s36
      %42 = dma.hbm_to_vmem [thread:$0]  %s35, 256, %s37, [#allocation6], 128, 128, 8
    $region9: #{tpu_custom_call.1} parent=1 // pred_fallthru
      _
    // Predicated region
    $region10: #{tpu_custom_call.1} parent=1 // pred_check
      _
    $region11: #{tpu_custom_call.1} parent=1 // pred_check_branch
      %44 = sbr.rel (0) target = $region13
    $region12: #{tpu_custom_call.1} parent=1 // pred_region
      %46 = vsyncadd [#allocation6], 0
      %s47 = sshll.u32 %s2, 4
      %s48 = int_to_ptr.hbm [resolvable:$true] %s47
      %s49 = sshll.u32 [#allocation7], 4
      %s50 = int_to_ptr.vmem [resolvable:$true] %s49
      %55 = dma.hbm_to_vmem [thread:$0]  %s48, 512, %s50, [#allocation6], 128, 128, 8
    $region13: #{tpu_custom_call.1} parent=1 // pred_fallthru
      _
    // Predicated region
    $region14: #{tpu_custom_call.1} parent=1 // pred_check
      _
    $region15: #{tpu_custom_call.1} parent=1 // pred_check_branch
      %57 = sbr.rel (0) target = $region17
    $region16: #{tpu_custom_call.1} parent=1 // pred_region
      _
    $region17: #{tpu_custom_call.1} parent=1 // pred_fallthru
      _
    // Predicated region
    $region18: #{tpu_custom_call.1} parent=1 // pred_check
      _
    $region19: #{tpu_custom_call.1} parent=1 // pred_check_branch
      %59 = sbr.rel (0) target = $region21
    $region20: #{tpu_custom_call.1} parent=1 // pred_region
      %61 = vsyncadd [#allocation9], 0
      %s62 = sshll.u32 %s4, 4
      %s63 = int_to_ptr.hbm [resolvable:$true] %s62
      %s64 = sshll.u32 [#allocation8], 4
      %s65 = int_to_ptr.vmem [resolvable:$true] %s64
      %70 = dma.hbm_to_vmem [thread:$0]  %s63, 512, %s65, [#allocation9], 128, 128, 8
    $region21: #{tpu_custom_call.1} parent=1 // pred_fallthru
      _
    // Predicated region
    $region22: #{tpu_custom_call.1} parent=1 // pred_check
      _
    $region23: #{tpu_custom_call.1} parent=1 // pred_check_branch
      %72 = sbr.rel (0) target = $region25
    $region24: #{tpu_custom_call.1} parent=1 // pred_region
      _
    $region25: #{tpu_custom_call.1} parent=1 // pred_fallthru
      _
    // Predicated region
    $region26: #{tpu_custom_call.1} parent=1 // pred_check
      _
    $region27: #{tpu_custom_call.1} parent=1 // pred_check_branch
      %74 = sbr.rel (0) target = $region29
    $region28: #{tpu_custom_call.1} parent=1 // pred_region
      _
    $region29: #{tpu_custom_call.1} parent=1 // pred_fallthru
      _
    // Predicated region
    $region30: #{tpu_custom_call.1} parent=1 // pred_check
      _
    $region31: #{tpu_custom_call.1} parent=1 // pred_check_branch
      %76 = sbr.rel (0) target = $region33
    $region32: #{tpu_custom_call.1} parent=1 // pred_region
      %78 = dma.done [#allocation3], 32
    $region33: #{tpu_custom_call.1} parent=1 // pred_fallthru
      _
    // Predicated region
    $region34: #{tpu_custom_call.1} parent=1 // pred_check
      _
    $region35: #{tpu_custom_call.1} parent=1 // pred_check_branch
      %80 = sbr.rel (0) target = $region37
    $region36: #{tpu_custom_call.1} parent=1 // pred_region
      %82 = dma.done [#allocation6], 256
    $region37: #{tpu_custom_call.1} parent=1 // pred_fallthru
      _
    // Predicated region
    $region38: #{tpu_custom_call.1} parent=1 // pred_check
      _
    $region39: #{tpu_custom_call.1} parent=1 // pred_check_branch
      %84 = sbr.rel (0) target = $region41
    $region40: #{tpu_custom_call.1} parent=1 // pred_region
      %86 = dma.done [#allocation6], 512
    $region41: #{tpu_custom_call.1} parent=1 // pred_fallthru
      _
    // Predicated region
    $region42: #{tpu_custom_call.1} parent=1 // pred_check
      _
    $region43: #{tpu_custom_call.1} parent=1 // pred_check_branch
      %88 = sbr.rel (0) target = $region45
    $region44: #{tpu_custom_call.1} parent=1 // pred_region
      %90 = dma.done [#allocation9], 512
    $region45: #{tpu_custom_call.1} parent=1 // pred_fallthru
      _
    %v91 = vld [vmem:[#allocation2] sm:$0x3]
    %v92 = vld [vmem:[#allocation7] sm:$0xff]
    %v93 = vld [vmem:[#allocation7 + $0x8] sm:$0xff]
    %v94 = vld [vmem:[#allocation7 + $0x10] sm:$0xff]
    %v95 = vld [vmem:[#allocation7 + $0x18] sm:$0xff]
    %v96 = vld [vmem:[%s3] sm:$0x1]
    %v98 = vperm.slane %v96, 0
    %vm100 = vcmask 261120
    %v102 = vsel %vm100, %v91, 0
    %104 = vmatpush.msra.mxu0 0.0
    %105 = vmatpush.msra.mxu0 0.0
    %106 = vmatpush.msra.mxu0 0.0
    %107 = vmatpush.msra.mxu0 0.0
    %108 = vmatpush.msra.mxu0 0.0
    %109 = vmatpush.msra.mxu0 0.0
    %110 = vmatpush.msra.mxu0 0.0
    %111 = vmatpush.msra.mxu0 0.0
    %112 = vmatpush.msra.mxu0 0.0
    %113 = vmatpush.msra.mxu0 0.0
    %114 = vmatpush.msra.mxu0 0.0
    %115 = vmatpush.msra.mxu0 0.0
    %116 = vmatpush.msra.mxu0 %v95
    %117 = vmatpush.msra.mxu0 %v94
    %118 = vmatpush.msra.mxu0 %v93
    %119 = vmatpush.msra.mxu0 %v92
    %120 = vmatmul.f32.gmra.mxu0 %v102
    %v121 = vpop.f32.mrf.mxu0
    %v122 = vadd.f32 %v98, %v121
    %123 = vdwg.mxu0
    %v124 = vld [vmem:[#allocation5] sm:$0xff]
    %v125 = vld [vmem:[#allocation5 + $0x8] sm:$0xff]
    %v126 = vld [vmem:[#allocation8] sm:$0xff]
    %v127 = vld [vmem:[#allocation8 + $0x8] sm:$0xff]
    %v128 = vld [vmem:[#allocation8 + $0x10] sm:$0xff]
    %v129 = vld [vmem:[#allocation8 + $0x18] sm:$0xff]
    %v130 = vld [vmem:[%s5] sm:$0x1]
    %v132 = vperm.slane %v130, 0
    %v135 = vsel %vm100, %v124, 0
    %v138 = vsel %vm100, %v125, 0
    %140 = vmatpush.msra.mxu0 0.0
    %141 = vmatpush.msra.mxu0 0.0
    %142 = vmatpush.msra.mxu0 0.0
    %143 = vmatpush.msra.mxu0 0.0
    %144 = vmatpush.msra.mxu0 0.0
    %145 = vmatpush.msra.mxu0 0.0
    %146 = vmatpush.msra.mxu0 0.0
    %147 = vmatpush.msra.mxu0 0.0
    %148 = vmatpush.msra.mxu0 0.0
    %149 = vmatpush.msra.mxu0 0.0
    %150 = vmatpush.msra.mxu0 0.0
    %151 = vmatpush.msra.mxu0 0.0
    %152 = vmatpush.msra.mxu0 %v129
    %153 = vmatpush.msra.mxu0 %v128
    %154 = vmatpush.msra.mxu0 %v127
    %155 = vmatpush.msra.mxu0 %v126
    %156 = vmatmul.f32.gmra.mxu0 %v135
    %v157 = vpop.f32.mrf.mxu0
    %v158 = vadd.f32 %v132, %v157
    %159 = vmatmul.f32.gmra.mxu0 %v138
    %v160 = vpop.f32.mrf.mxu0
    %v161 = vadd.f32 %v132, %v160
    %162 = vdwg.mxu0
    %v164 = vrot.slane %v122, 1
    %v165 = vperm.slane %v122, 0
    %v166 = vperm.slane %v164, 0
    %v169 = vadd.f32 %v165, %v158
    %v170 = vadd.f32 %v166, %v161
    %v171 = vtanh.pop %v169
    %v172 = vtanh.pop %v170
    %v173 = vld [vmem:[%s6] sm:$0x1]
    %v175 = vperm.slane %v173, 0
    %v177 = vmul.f32 %v171, %v175
    %v178 = vmul.f32 %v172, %v175
    %v179 = vsel %vm100, %v177, 0.0
    %180 = vadd.xlane.f32.xlu0 %v179
    %v181 = vpop.xlane.xlu0 %180
    %v182 = vsel %vm100, %v178, 0.0
    %183 = vadd.xlane.f32.xlu0 %v182
    %v184 = vpop.xlane.xlu0 %183
    %v187 = vlaneseq
    %v188 = vand.u32 %v187, 127
    %v189 = vperm.slane %v181, %v188
    %v190 = vperm.slane %v184, %v188
    %vm191 = vcmask 1041409
    %v192 = vsel %vm191, %v190, %v189
    %vm194 = vcmask 58368
    %v195 = vsel %vm194, %v192, -inf
    %196 = vmax.xlane.f32.xlu0 %v195
    %v197 = vpop.xlane.xlu0 %196
    %v199 = vperm.slane %v197, 0
    %v200 = vperm.slane %v197, 1
    %v203 = vsub.f32 %v181, %v199
    %v204 = vsub.f32 %v184, %v200
    %v205 = vmul.f32 %v203, 1.442695
    %v206 = vpow.pop %v205
    %v207 = vmul.f32 %v204, 1.442695
    %v208 = vpow.pop %v207
    %211 = vset.pattern.permute.xlu0 0
    %212 = vperm.xlu0 %211, %v206
    %v213 = vpop.permute.xlu0 %212
    %214 = vset.pattern.permute.xlu0 0
    %215 = vperm.xlu0 %214, %v208
    %v216 = vpop.permute.xlu0 %215
    %v217 = vperm.slane %v213, %v188
    %v218 = vperm.slane %v216, %v188
    %v219 = vsel %vm191, %v218, %v217
    %v221 = vsel %vm194, %v219, 0.0
    %222 = vadd.xlane.f32.xlu0 %v221
    %v223 = vpop.xlane.xlu0 %222
    %v224 = vrcp.pop %v223
    %v225 = vmul.f32 %v223, %v224
    %v226 = vsub.f32 2.0, %v225
    %v227 = vmul.f32 %v224, %v226
    %v230 = vmul.f32 %v213, %v158
    %v231 = vmul.f32 %v216, %v161
    %vm232 = vcmask 523520
    %v233 = vsel %vm232, %v230, 0.0
    %v234 = vrot.slane %v233, 4
    %v235 = vadd.f32 %v233, %v234
    %v236 = vrot.slane %v235, 2
    %v237 = vadd.f32 %v235, %v236
    %v238 = vrot.slane %v237, 1
    %v239 = vadd.f32 %v237, %v238
    %v240 = vsel %vm232, %v231, 0.0
    %v241 = vrot.slane %v240, 4
    %v242 = vadd.f32 %v240, %v241
    %v243 = vrot.slane %v242, 2
    %v244 = vadd.f32 %v242, %v243
    %v245 = vrot.slane %v244, 1
    %v246 = vadd.f32 %v244, %v245
    %v248 = vrot.slane %v227, 1
    %v251 = vmul.f32 %v239, %v227
    %v252 = vmul.f32 %v246, %v248
    %v255 = vrot.slane %v252, 7
    %v256 = vsel %vm191, %v255, %v251
    %257 = vrot.lane.b32.xlu0 %v256, 96
    %v258 = vpop.permute.xlu0 %257
    %vm260 = vcmask 254976
    %261 = vst.msk [vmem:[#allocation10] sm:$0x3] %vm260, %v258
    %v262 = vperm.slane %v227, 0
    %v263 = vperm.slane %v227, 1
    %v266 = vmul.f32 %v206, %v262
    %v267 = vmul.f32 %v208, %v263
    %270 = vset.pattern.permute.xlu0 0
    %271 = vperm.xlu0 %270, %v266
    %v272 = vpop.permute.xlu0 %271
    %273 = vset.pattern.permute.xlu0 0
    %274 = vperm.xlu0 %273, %v267
    %v275 = vpop.permute.xlu0 %274
    %v276 = vperm.slane %v272, %v188
    %v277 = vperm.slane %v275, %v188
    %v278 = vsel %vm191, %v277, %v276
    %280 = vst.msk [vmem:[#allocation11] sm:$0x3] %vm194, %v278
    // Predicated region
    $region46: #{tpu_custom_call.1} parent=1 // pred_check
      _
    $region47: #{tpu_custom_call.1} parent=1 // pred_check_branch
      %282 = sbr.rel (0) target = $region49
    $region48: #{tpu_custom_call.1} parent=1 // pred_region
      %284 = vsyncadd [#allocation4], 0
      %s286 = sshll.u32 [#allocation10], 4
      %s287 = int_to_ptr.vmem [resolvable:$true] %s286
      %s288 = sshll.u32 %s7, 4
      %s289 = int_to_ptr.hbm [resolvable:$true] %s288
      %291 = dma.vmem_to_hbm [thread:$0]  %s287, 32, %s289, [#allocation4]
    $region49: #{tpu_custom_call.1} parent=1 // pred_fallthru
      _
    // Predicated region
    $region50: #{tpu_custom_call.1} parent=1 // pred_check
      _
    $region51: #{tpu_custom_call.1} parent=1 // pred_check_branch
      %293 = sbr.rel (0) target = $region53
    $region52: #{tpu_custom_call.1} parent=1 // pred_region
      %295 = vsyncadd [#allocation12], 0
      %s297 = sshll.u32 [#allocation11], 4
      %s298 = int_to_ptr.vmem [resolvable:$true] %s297
      %s299 = sshll.u32 %s8, 4
      %s300 = int_to_ptr.hbm [resolvable:$true] %s299
      %302 = dma.vmem_to_hbm [thread:$0]  %s298, 32, %s300, [#allocation12]
    $region53: #{tpu_custom_call.1} parent=1 // pred_fallthru
      _
    // Predicated region
    $region54: #{tpu_custom_call.1} parent=1 // pred_check
      _
    $region55: #{tpu_custom_call.1} parent=1 // pred_check_branch
      %304 = sbr.rel (0) target = $region57
    $region56: #{tpu_custom_call.1} parent=1 // pred_region
      %306 = dma.done [#allocation4], 32
    $region57: #{tpu_custom_call.1} parent=1 // pred_fallthru
      _
    // Predicated region
    $region58: #{tpu_custom_call.1} parent=1 // pred_check
      _
    $region59: #{tpu_custom_call.1} parent=1 // pred_check_branch
      %308 = sbr.rel (0) target = $region61
    $region60: #{tpu_custom_call.1} parent=1 // pred_region
      %310 = dma.done [#allocation12], 32
    $region61: #{tpu_custom_call.1} parent=1 // pred_fallthru
      _
    %311 = vsyncpa [#allocation3], 1
    %312 = vsyncpa [#allocation6], 1
    %313 = vsyncpa [#allocation9], 1
    %314 = vsyncpa [#allocation4], 1
    %315 = vsyncpa [#allocation12], 1

</llo_original>
